<compile_context>
chip_gen: v6e
topology: v6e:2x2x1
jax: 0.10.0
libtpu: 0.0.40
codegen_flags: <defaults>
</compile_context>

<pallas_src>
import jax
import jax.numpy as jnp
from jax import lax
from jax.experimental import pallas as pl
from jax.experimental.pallas import tpu as pltpu

EPS = 1e-6


def _layernorm(y, gamma, beta):
    """LayerNorm over the last axis; one-pass moments, all f32."""
    inv_h = 1.0 / y.shape[-1]
    s1 = jnp.sum(y, axis=-1, keepdims=True)        # the two XLU reductions can
    s2 = jnp.sum(y * y, axis=-1, keepdims=True)    # overlap (no serial chain)
    mean = s1 * inv_h
    var = jnp.maximum(s2 * inv_h - mean * mean, 0.0)   # guard cancellation
    inv_std = lax.rsqrt(var + EPS)                     # EUP slot, ~free
    return (y - mean) * inv_std * gamma + beta


def _fused_kernel(x_ref, w_ref, b_ref, g_ref, beta_ref, o_ref):
    # x: (tm, H) activations (f32 or bf16); w: (H, H) bf16; b/g/beta: (1, H) f32
    x = x_ref[...]
    sub = jnp.dot(x.astype(jnp.bfloat16), w_ref[...],
                  preferred_element_type=jnp.float32)
    y = x.astype(jnp.float32) + sub + b_ref[...]
    o_ref[...] = _layernorm(y, g_ref[...], beta_ref[...]).astype(o_ref.dtype)


def _fused_kernel_ktiled(xk_ref, xres_ref, w_ref, b_ref, g_ref, beta_ref,
                         o_ref, acc_ref):
    # Grid = (row tiles, K tiles); K reduction axis is innermost ("arbitrary").
    k = pl.program_id(1)

    @pl.when(k == 0)
    def _():                      # residual init with the full-width x row tile
        acc_ref[...] = xres_ref[...].astype(jnp.float32)

    acc_ref[...] += jnp.dot(xk_ref[...].astype(jnp.bfloat16), w_ref[...],
                            preferred_element_type=jnp.float32)

    @pl.when(k == pl.num_programs(1) - 1)
    def _():                      # finalize: + bias, LayerNorm, store
        y = acc_ref[...] + b_ref[...]
        o_ref[...] = _layernorm(y, g_ref[...], beta_ref[...]).astype(o_ref.dtype)


def _round_up(n, m):
    return ((n + m - 1) // m) * m


def _choose_tk(H, requested):
    if requested is not None:
        if requested != H:
            assert H % requested == 0 and requested % 128 == 0, \
                "tk must divide H and be a multiple of 128"
        return requested
    # Keep full-K matmul while single-buffered bf16 W stays <= ~8 MiB (H<=2048);
    # beyond that K-tile so the per-step W block fits comfortably on v7x.
    if H * H * 2 <= 8 * 1024 * 1024:
        return H
    for cand in (2048, 1024, 512, 256, 128):
        if H % cand == 0:
            return cand
    return H                      # awkward H: fall back to un-tiled K


def _budget_bytes(tm, tk, H, n_k, item):
    if n_k == 1:
        return (2 * tm * H * item          # x tiles (double-buffered)
                + 2 * tm * H * item        # out tiles (double-buffered)
                + H * H * 2                # W, bf16, single-buffered
                + 3 * H * 4                # b / gamma / beta (single-buffered)
                + 3 * tm * H * 4)          # f32 temporaries headroom
    return (2 * tm * tk * item             # x K-chunks (double-buffered)
            + 2 * tm * H * item            # full-width residual x
            + 2 * tk * H * 2               # W K-blocks, bf16, double-buffered
            + 3 * H * 4                    # params
            + 2 * tm * H * item            # out tiles
            + tm * H * 4                   # f32 accumulator scratch
            + 2 * tm * H * 4)              # finalize temporaries headroom


def prepare_params(w, b, gamma, beta):
    """One-time parameter prep (call once at setup, NOT per forward step)."""
    H = w.shape[-1]
    return (w.astype(jnp.bfloat16),
            jnp.asarray(b, dtype=jnp.float32).reshape(1, H),
            jnp.asarray(gamma, dtype=jnp.float32).reshape(1, H),
            jnp.asarray(beta, dtype=jnp.float32).reshape(1, H))


def sublayer_connection(x, w, b, gamma, beta, *, tm=512, tk=None):
    """LayerNorm(x + x @ w + b) over the last axis.  x: [..., H]."""
    orig_shape = x.shape
    H = orig_shape[-1]
    x2 = x.reshape(-1, H)
    M = x2.shape[0]

    # Prefer prepare_params() once at setup; these are no-ops when prepared.
    if w.dtype != jnp.bfloat16:
        w = w.astype(jnp.bfloat16)
    b2 = jnp.asarray(b, dtype=jnp.float32).reshape(1, H)
    g2 = jnp.asarray(gamma, dtype=jnp.float32).reshape(1, H)
    beta2 = jnp.asarray(beta, dtype=jnp.float32).reshape(1, H)

    tk = _choose_tk(H, tk)
    n_k = H // tk
    item = x2.dtype.itemsize

    # Row tile: multiple of 8 sublanes, clamped to the problem, >= 2 tiles where
    # possible (v7x has 2 TensorCores), shrunk until the VMEM budget closes.
    tm = max(8, min(tm, _round_up(M, 8)))
    if M > 8 and pl.cdiv(M, tm) < 2:
        tm = max(8, _round_up(pl.cdiv(M, 2), 8))

    try:
        phys_vmem = pltpu.get_tpu_info().vmem_capacity_bytes
    except Exception:
        phys_vmem = 64 * 1024 * 1024          # conservative: v7x per-TC VMEM
    vmem_cap = (phys_vmem * 3) // 4           # leave compiler headroom

    while tm > 8 and _budget_bytes(tm, tk, H, n_k, item) > vmem_cap:
        tm = max(8, _round_up(tm // 2, 8))

    budget = _budget_bytes(tm, tk, H, n_k, item)
    vmem_limit_bytes = min(vmem_cap, max(32 * 1024 * 1024, int(budget * 1.25)))

    n_rows = pl.cdiv(M, tm)
    cost = pl.CostEstimate(
        flops=2 * M * H * H,
        transcendentals=M,                    # one rsqrt per row
        bytes_accessed=(M * H * item * (1 if n_k == 1 else 2)   # x read(s)
                        + M * H * item                          # out write
                        + H * H * 2 * (1 if n_k == 1 else n_rows)
                        + 3 * H * 4),
    )

    inv = dict(pipeline_mode=pl.Buffered(1))  # single-buffer invariant inputs

    if n_k == 1:
        grid_spec = pltpu.PrefetchScalarGridSpec(
            num_scalar_prefetch=0,
            grid=(n_rows,),
            in_specs=[
                pl.BlockSpec((tm, H), lambda i: (i, 0)),          # x row tile
                pl.BlockSpec((H, H), lambda i: (0, 0), **inv),    # W (invariant)
                pl.BlockSpec((1, H), lambda i: (0, 0), **inv),    # b
                pl.BlockSpec((1, H), lambda i: (0, 0), **inv),    # gamma
                pl.BlockSpec((1, H), lambda i: (0, 0), **inv),    # beta
            ],
            out_specs=pl.BlockSpec((tm, H), lambda i: (i, 0)),
        )
        out = pl.pallas_call(
            _fused_kernel,
            out_shape=jax.ShapeDtypeStruct((M, H), x.dtype),
            grid_spec=grid_spec,
            compiler_params=pltpu.CompilerParams(
                dimension_semantics=("parallel",),
                vmem_limit_bytes=vmem_limit_bytes),
            cost_estimate=cost,
        )(x2, w, b2, g2, beta2)
    else:
        grid_spec = pltpu.PrefetchScalarGridSpec(
            num_scalar_prefetch=0,
            grid=(n_rows, n_k),
            in_specs=[
                pl.BlockSpec((tm, tk), lambda i, k: (i, k)),      # x K-chunk
                pl.BlockSpec((tm, H), lambda i, k: (i, 0)),       # x residual
                pl.BlockSpec((tk, H), lambda i, k: (k, 0)),       # W K-block
                pl.BlockSpec((1, H), lambda i, k: (0, 0), **inv), # b
                pl.BlockSpec((1, H), lambda i, k: (0, 0), **inv), # gamma
                pl.BlockSpec((1, H), lambda i, k: (0, 0), **inv), # beta
            ],
            out_specs=pl.BlockSpec((tm, H), lambda i, k: (i, 0)),
            scratch_shapes=[pltpu.VMEM((tm, H), jnp.float32)],
        )
        out = pl.pallas_call(
            _fused_kernel_ktiled,
            out_shape=jax.ShapeDtypeStruct((M, H), x.dtype),
            grid_spec=grid_spec,
            compiler_params=pltpu.CompilerParams(
                dimension_semantics=("parallel", "arbitrary"),
                vmem_limit_bytes=vmem_limit_bytes),
            cost_estimate=cost,
        )(x2, x2, w, b2, g2, beta2)

    return out.reshape(orig_shape)


def reference(x, w, b, gamma, beta):
    xf = x.astype(jnp.float32)
    y = xf + (xf @ w.astype(jnp.float32) + b.astype(jnp.float32))
    mean = jnp.mean(y, axis=-1, keepdims=True)
    var = jnp.mean((y - mean) ** 2, axis=-1, keepdims=True)
    return ((y - mean) / jnp.sqrt(var + EPS)) * gamma + beta


if __name__ == "__main__":
    B, S, H = 2, 16, 256          # H multiple of 128 -> lane-dense output tiles
    key = jax.random.PRNGKey(0)
    kx, kw, kb = jax.random.split(key, 3)

    x = jax.random.normal(kx, (B, S, H), dtype=jnp.float32)
    w = jax.random.normal(kw, (H, H), dtype=jnp.float32) * 0.05   # Linear(H, H)
    b = jax.random.normal(kb, (H,), dtype=jnp.float32) * 0.01
    gamma = jnp.ones((H,), dtype=jnp.float32)                     # LayerNorm init
    beta = jnp.zeros((H,), dtype=jnp.float32)

    wq, bq, gq, betaq = prepare_params(w, b, gamma, beta)         # one-time prep
    ref = reference(x, w, b, gamma, beta)

    # Path 1: fused single-K kernel, f32 activations.
    out = jax.block_until_ready(sublayer_connection(x, wq, bq, gq, betaq))
    assert out.shape == (B, S, H) and out.dtype == x.dtype
    assert jnp.allclose(out, ref, atol=5e-2, rtol=5e-2), "path1 mismatch"

    # Path 2: K-tiled accumulator kernel (forced tk < H to exercise it).
    out_kt = jax.block_until_ready(
        sublayer_connection(x, wq, bq, gq, betaq, tk=128))
    assert jnp.allclose(out_kt, ref, atol=5e-2, rtol=5e-2), "path2 mismatch"

    # bf16 activations: halves HBM / store traffic; LN math stays f32 in-kernel.
    out_bf = jax.block_until_ready(
        sublayer_connection(x.astype(jnp.bfloat16), wq, bq, gq, betaq))
    assert out_bf.dtype == jnp.bfloat16
    assert jnp.allclose(out_bf.astype(jnp.float32), ref,
                        atol=1e-1, rtol=1e-1), "bf16 path mismatch"

    print("KERNEL_OK")
</pallas_src>

<mosaic_0001>
module attributes {stable_mosaic.version = 11 : i64} {
  func.func @_fused_kernel(%arg0: i32, %arg1: memref<16x256xf32, #tpu.memory_space<vmem>>, %arg2: memref<256x256xbf16, #tpu.memory_space<vmem>>, %arg3: memref<1x256xf32, #tpu.memory_space<vmem>>, %arg4: memref<1x256xf32, #tpu.memory_space<vmem>>, %arg5: memref<1x256xf32, #tpu.memory_space<vmem>>, %arg6: memref<16x256xf32, #tpu.memory_space<vmem>>) attributes {dimension_semantics = [#tpu.dimension_semantics<parallel>], iteration_bounds = array<i64: 2>, scalar_prefetch = 0 : i64, scratch_operands = 0 : i64, tpu.core_type = #tpu.core_type<tc>, window_params = [{transform_indices = @transform_0, window_bounds = array<i64: 16, 256>}, {pipeline_mode = #tpu.pipeline_mode<synchronous>, transform_indices = @transform_1, window_bounds = array<i64: 256, 256>}, {pipeline_mode = #tpu.pipeline_mode<synchronous>, transform_indices = @transform_2, window_bounds = array<i64: 1, 256>}, {pipeline_mode = #tpu.pipeline_mode<synchronous>, transform_indices = @transform_3, window_bounds = array<i64: 1, 256>}, {pipeline_mode = #tpu.pipeline_mode<synchronous>, transform_indices = @transform_4, window_bounds = array<i64: 1, 256>}, {transform_indices = @transform_5, window_bounds = array<i64: 16, 256>}]} {
    %c0 = arith.constant 0 : index
    %c0_0 = arith.constant 0 : index
    %0 = vector.load %arg1[%c0, %c0_0] : memref<16x256xf32, #tpu.memory_space<vmem>>, vector<16x256xf32>
    %1 = arith.truncf %0 : vector<16x256xf32> to vector<16x256xbf16>
    %c0_1 = arith.constant 0 : index
    %c0_2 = arith.constant 0 : index
    %2 = vector.load %arg2[%c0_1, %c0_2] : memref<256x256xbf16, #tpu.memory_space<vmem>>, vector<256x256xbf16>
    %cst = arith.constant dense<0.000000e+00> : vector<16x256xf32>
    %3 = tpu.matmul %1, %2, %cst {dimension_numbers = #tpu.dot_dimension_numbers<[1], [0], [0], [1], [0, 0, 1, 1], [], []>} : vector<16x256xbf16>, vector<256x256xbf16>, vector<16x256xf32> -> vector<16x256xf32>
    %4 = arith.addf %0, %3 : vector<16x256xf32>
    %c0_3 = arith.constant 0 : index
    %c0_4 = arith.constant 0 : index
    %5 = vector.load %arg3[%c0_3, %c0_4] : memref<1x256xf32, #tpu.memory_space<vmem>>, vector<1x256xf32>
    %6 = vector.broadcast %5 : vector<1x256xf32> to vector<16x256xf32>
    %7 = arith.addf %4, %6 : vector<16x256xf32>
    %c0_5 = arith.constant 0 : index
    %c0_6 = arith.constant 0 : index
    %8 = vector.load %arg4[%c0_5, %c0_6] : memref<1x256xf32, #tpu.memory_space<vmem>>, vector<1x256xf32>
    %c0_7 = arith.constant 0 : index
    %c0_8 = arith.constant 0 : index
    %9 = vector.load %arg5[%c0_7, %c0_8] : memref<1x256xf32, #tpu.memory_space<vmem>>, vector<1x256xf32>
    %cst_9 = arith.constant dense<0.000000e+00> : vector<16xf32>
    %10 = vector.multi_reduction <add>, %7, %cst_9 [1] : vector<16x256xf32> to vector<16xf32>
    %11 = vector.shape_cast %10 : vector<16xf32> to vector<16x1xf32>
    %12 = arith.mulf %7, %7 : vector<16x256xf32>
    %cst_10 = arith.constant dense<0.000000e+00> : vector<16xf32>
    %13 = vector.multi_reduction <add>, %12, %cst_10 [1] : vector<16x256xf32> to vector<16xf32>
    %14 = vector.shape_cast %13 : vector<16xf32> to vector<16x1xf32>
    %cst_11 = arith.constant 3.906250e-03 : f32
    %15 = vector.broadcast %cst_11 : f32 to vector<16x1xf32>
    %16 = arith.mulf %11, %15 : vector<16x1xf32>
    %cst_12 = arith.constant 3.906250e-03 : f32
    %17 = vector.broadcast %cst_12 : f32 to vector<16x1xf32>
    %18 = arith.mulf %14, %17 : vector<16x1xf32>
    %19 = arith.mulf %16, %16 : vector<16x1xf32>
    %20 = arith.subf %18, %19 : vector<16x1xf32>
    %cst_13 = arith.constant 0.000000e+00 : f32
    %21 = vector.broadcast %cst_13 : f32 to vector<16x1xf32>
    %22 = arith.maximumf %20, %21 : vector<16x1xf32>
    %cst_14 = arith.constant 9.99999997E-7 : f32
    %23 = vector.broadcast %cst_14 : f32 to vector<16x1xf32>
    %24 = arith.addf %22, %23 : vector<16x1xf32>
    %25 = math.rsqrt %24 : vector<16x1xf32>
    %26 = vector.broadcast %16 : vector<16x1xf32> to vector<16x256xf32>
    %27 = arith.subf %7, %26 : vector<16x256xf32>
    %28 = vector.broadcast %25 : vector<16x1xf32> to vector<16x256xf32>
    %29 = arith.mulf %27, %28 : vector<16x256xf32>
    %30 = vector.broadcast %8 : vector<1x256xf32> to vector<16x256xf32>
    %31 = arith.mulf %29, %30 : vector<16x256xf32>
    %32 = vector.broadcast %9 : vector<1x256xf32> to vector<16x256xf32>
    %33 = arith.addf %31, %32 : vector<16x256xf32>
    %c0_15 = arith.constant 0 : index
    %c0_16 = arith.constant 0 : index
    %34 = vector.load %arg6[%c0_15, %c0_16] : memref<16x256xf32, #tpu.memory_space<vmem>>, vector<16x256xf32>
    tpu.vector_store %arg6[%c0_15, %c0_16], %33 {strides = array<i32>} : memref<16x256xf32, #tpu.memory_space<vmem>>, vector<16x256xf32>,
    return
  }
  func.func @transform_0(%arg0: i32) -> (i32, i32) {
    %c0_i32 = arith.constant 0 : i32
    %c0_i32_0 = arith.constant 0 : i32
    return %arg0, %c0_i32 : i32, i32
  }
  func.func @transform_1(%arg0: i32) -> (i32, i32) {
    %c0_i32 = arith.constant 0 : i32
    %c0_i32_0 = arith.constant 0 : i32
    %c0_i32_1 = arith.constant 0 : i32
    return %c0_i32, %c0_i32_0 : i32, i32
  }
  func.func @transform_2(%arg0: i32) -> (i32, i32) {
    %c0_i32 = arith.constant 0 : i32
    %c0_i32_0 = arith.constant 0 : i32
    %c0_i32_1 = arith.constant 0 : i32
    return %c0_i32, %c0_i32_0 : i32, i32
  }
  func.func @transform_3(%arg0: i32) -> (i32, i32) {
    %c0_i32 = arith.constant 0 : i32
    %c0_i32_0 = arith.constant 0 : i32
    %c0_i32_1 = arith.constant 0 : i32
    return %c0_i32, %c0_i32_0 : i32, i32
  }
  func.func @transform_4(%arg0: i32) -> (i32, i32) {
    %c0_i32 = arith.constant 0 : i32
    %c0_i32_0 = arith.constant 0 : i32
    %c0_i32_1 = arith.constant 0 : i32
    return %c0_i32, %c0_i32_0 : i32, i32
  }
  func.func @transform_5(%arg0: i32) -> (i32, i32) {
    %c0_i32 = arith.constant 0 : i32
    %c0_i32_0 = arith.constant 0 : i32
    return %arg0, %c0_i32 : i32, i32
  }
}

</mosaic_0001>

<llo_original>
// kernel: tpu_custom_call.1
$region0: #{tpu_custom_call.1}
  #allocation0 [shape = 'u32[]', space=smem, size = 0x4, offset = 0x4, fixed_abs, tag = 'smem constant byte address 0x4 - core index']
  #allocation1 [shape = 'u32[144,128]{1,0:T(1,128)}', space=vmem, size = 0x12000, scoped, tag = 'internal scratch']
  %s0 = inlined_call_operand.hbm [shape: f32[32,256], index: 0, kind: input, shape index: {}]
  %s1 = inlined_call_operand.hbm [shape: bf16[256,256], index: 1, kind: input, shape index: {}]
  %s2 = inlined_call_operand.vmem [shape: f32[1,256], index: 2, kind: input, shape index: {}]
  %s3 = inlined_call_operand.vmem [shape: f32[1,256], index: 3, kind: input, shape index: {}]
  %s4 = inlined_call_operand.vmem [shape: f32[1,256], index: 4, kind: input, shape index: {}]
  %s5 = inlined_call_operand.hbm [shape: f32[32,256], index: 5, kind: output, shape index: {}]
  %s6 = sld [smem:[#allocation0]]
  $region61: #{tpu_custom_call.1} parent=0
    _
  %s8 = ssub.s32 1, %s6
  %s9 = scalar_select 0, %s8, %s6
  $region1: #{tpu_custom_call.1} parent=0
    #allocation2 [shape = 'u8[32768]{0}', space=vmem, size = 0x8000, scoped, tag = 'input window, operand 0']
    #allocation3 [shape = 's32[2]{0}', space=sflag, size = 0x8, scoped, tag = 'scoped memory for tpu_custom_call.1']
    #allocation4 [shape = 's32[2]{0}', space=sflag, size = 0x8, scoped, tag = 'scoped memory for tpu_custom_call.1']
    #allocation5 [shape = 'u8[131072]{0}', space=vmem, size = 0x20000, scoped, tag = 'input window, operand 1, single buffered']
    #allocation6 [shape = 's32[1]{0}', space=sflag, size = 0x4, scoped, tag = 'scoped memory for tpu_custom_call.1']
    #allocation7 [shape = 'u8[32768]{0}', space=vmem, size = 0x8000, scoped, tag = 'output window, operand 0']
    %10 = vsyncpa [#allocation3], 0
    %s11 = scalar_lea.sflag [#allocation3], 1
    %12 = vsyncpa %s11, 0
    %13 = vsyncpa [#allocation6], 0
    %14 = vsyncpa [#allocation4], 0
    %s15 = scalar_lea.sflag [#allocation4], 1
    %16 = vsyncpa %s15, 0
    loop: start=0, step=1, limit=4
    $region2: #{tpu_custom_call.1} parent=1 // loop_pre_header
      _
    $region3: #{tpu_custom_call.1} parent=1 // loop_header
      %s18 = sphi 0, %s22
      %p19 = scmp.ge.s32.totalorder %s18, 4
      %s28 = sphi 0, %s30
      %s31 = sphi 0, %s28
      %s32 = sphi 0, %s31
      %s48 = sphi 0, %s32
      %s52 = sphi 0, %s52
      %s54 = sphi 0, %s52
      %s55 = sphi 0, %s54
      %s69 = sphi 0, %s55
      %s73 = sphi 0, %s73
      %s75 = sphi 0, %s73
      %s76 = sphi 0, %s75
      %s90 = sphi 0, %s76
      %s94 = sphi 0, %s94
      %s96 = sphi 0, %s94
      %s97 = sphi 0, %s96
      %s111 = sphi 0, %s97
      %s115 = sphi 0, %s115
      %s117 = sphi 0, %s115
      %s118 = sphi 0, %s117
      %s132 = sphi 0, %s118
      %s138 = sphi 0, %s140
      %s141 = sphi 0, %s138
      %s142 = sphi 0, %s141
      %s158 = sphi 0, %s142
    $region4: #{tpu_custom_call.1} parent=1 // loop_header_branch
      %21 = sbr.rel (%p19) target = $region8
    $region5: #{tpu_custom_call.1} parent=1 // loop_body
      %s23 = ssub.s32 %s18, 1
      %s24 = ssub.s32 %s18, 2
      %s25 = sadd.s32 %s18, 1
      %s26 = ssub.s32 %s18, %s25
      %p27 = scmp.eq.s32.totalorder %s26, 0
      %s29 = sadd.s32 %s28, 1
      %s30 = scalar_select %p27, %s28, %s29
      %p33 = pneg %p27
      %p34 = scmp.eq.s32.totalorder %s18, 1
      %p35 = por %p33, %p34
      %p36 = scmp.ne.s32.totalorder %s28, %s31
      %p37 = scmp.eq.s32.totalorder %s18, 0
      %p38 = por %p36, %p37
      %p39 = scmp.ne.s32.totalorder %s28, %s31
      %p40 = scmp.eq.s32.totalorder %s23, 1
      %p41 = por %p39, %p40
      %p42 = scmp.ne.s32.totalorder %s31, %s32
      %p43 = scmp.eq.s32.totalorder %s23, 0
      %p44 = por %p42, %p43
      %p45 = scmp.ne.s32.totalorder %s31, %s32
      %p46 = scmp.eq.s32.totalorder %s24, 1
      %p47 = por %p45, %p46
      %p49 = scmp.ne.s32.totalorder %s32, %s48
      %p50 = scmp.eq.s32.totalorder %s24, 0
      %p51 = por %p49, %p50
      %s53 = sadd.s32 %s52, 1
      %p56 = scmp.eq.s32.totalorder %s18, 1
      %p57 = scmp.ne.s32.totalorder %s52, %s54
      %p58 = scmp.eq.s32.totalorder %s18, 0
      %p59 = por %p57, %p58
      %p60 = scmp.ne.s32.totalorder %s52, %s54
      %p61 = scmp.eq.s32.totalorder %s23, 1
      %p62 = por %p60, %p61
      %p63 = scmp.ne.s32.totalorder %s54, %s55
      %p64 = scmp.eq.s32.totalorder %s23, 0
      %p65 = por %p63, %p64
      %p66 = scmp.ne.s32.totalorder %s54, %s55
      %p67 = scmp.eq.s32.totalorder %s24, 1
      %p68 = por %p66, %p67
      %p70 = scmp.ne.s32.totalorder %s55, %s69
      %p71 = scmp.eq.s32.totalorder %s24, 0
      %p72 = por %p70, %p71
      %s74 = sadd.s32 %s73, 1
      %p77 = scmp.eq.s32.totalorder %s18, 1
      %p78 = scmp.ne.s32.totalorder %s73, %s75
      %p79 = scmp.eq.s32.totalorder %s18, 0
      %p80 = por %p78, %p79
      %p81 = scmp.ne.s32.totalorder %s73, %s75
      %p82 = scmp.eq.s32.totalorder %s23, 1
      %p83 = por %p81, %p82
      %p84 = scmp.ne.s32.totalorder %s75, %s76
      %p85 = scmp.eq.s32.totalorder %s23, 0
      %p86 = por %p84, %p85
      %p87 = scmp.ne.s32.totalorder %s75, %s76
      %p88 = scmp.eq.s32.totalorder %s24, 1
      %p89 = por %p87, %p88
      %p91 = scmp.ne.s32.totalorder %s76, %s90
      %p92 = scmp.eq.s32.totalorder %s24, 0
      %p93 = por %p91, %p92
      %s95 = sadd.s32 %s94, 1
      %p98 = scmp.eq.s32.totalorder %s18, 1
      %p99 = scmp.ne.s32.totalorder %s94, %s96
      %p100 = scmp.eq.s32.totalorder %s18, 0
      %p101 = por %p99, %p100
      %p102 = scmp.ne.s32.totalorder %s94, %s96
      %p103 = scmp.eq.s32.totalorder %s23, 1
      %p104 = por %p102, %p103
      %p105 = scmp.ne.s32.totalorder %s96, %s97
      %p106 = scmp.eq.s32.totalorder %s23, 0
      %p107 = por %p105, %p106
      %p108 = scmp.ne.s32.totalorder %s96, %s97
      %p109 = scmp.eq.s32.totalorder %s24, 1
      %p110 = por %p108, %p109
      %p112 = scmp.ne.s32.totalorder %s97, %s111
      %p113 = scmp.eq.s32.totalorder %s24, 0
      %p114 = por %p112, %p113
      %s116 = sadd.s32 %s115, 1
      %p119 = scmp.eq.s32.totalorder %s18, 1
      %p120 = scmp.ne.s32.totalorder %s115, %s117
      %p121 = scmp.eq.s32.totalorder %s18, 0
      %p122 = por %p120, %p121
      %p123 = scmp.ne.s32.totalorder %s115, %s117
      %p124 = scmp.eq.s32.totalorder %s23, 1
      %p125 = por %p123, %p124
      %p126 = scmp.ne.s32.totalorder %s117, %s118
      %p127 = scmp.eq.s32.totalorder %s23, 0
      %p128 = por %p126, %p127
      %p129 = scmp.ne.s32.totalorder %s117, %s118
      %p130 = scmp.eq.s32.totalorder %s24, 1
      %p131 = por %p129, %p130
      %p133 = scmp.ne.s32.totalorder %s118, %s132
      %p134 = scmp.eq.s32.totalorder %s24, 0
      %p135 = por %p133, %p134
      %s136 = ssub.s32 %s18, %s25
      %p137 = scmp.eq.s32.totalorder %s136, 0
      %s139 = sadd.s32 %s138, 1
      %s140 = scalar_select %p137, %s138, %s139
      %p143 = pneg %p137
      %p144 = scmp.eq.s32.totalorder %s18, 1
      %p145 = por %p143, %p144
      %p146 = scmp.ne.s32.totalorder %s138, %s141
      %p147 = scmp.eq.s32.totalorder %s18, 0
      %p148 = por %p146, %p147
      %p149 = scmp.ne.s32.totalorder %s138, %s141
      %p150 = scmp.eq.s32.totalorder %s23, 1
      %p151 = por %p149, %p150
      %p152 = scmp.ne.s32.totalorder %s141, %s142
      %p153 = scmp.eq.s32.totalorder %s23, 0
      %p154 = por %p152, %p153
      %p155 = scmp.ne.s32.totalorder %s141, %s142
      %p156 = scmp.eq.s32.totalorder %s24, 1
      %p157 = por %p155, %p156
      %p159 = scmp.ne.s32.totalorder %s142, %s158
      %p160 = scmp.eq.s32.totalorder %s24, 0
      %p161 = por %p159, %p160
      %p162 = scmp.le.s32.totalorder 1, %s18
      %p163 = scmp.lt.s32.totalorder %s18, 3
      %p164 = pnand %p162, %p163
      %p165 = pneg %p164
      // Predicated region
      $region9: #{tpu_custom_call.1} parent=5 // pred_check
        _
      $region10: #{tpu_custom_call.1} parent=5 // pred_check_branch
        %167 = sbr.rel (%p164) target = $region12
      $region11: #{tpu_custom_call.1} parent=5 // pred_region
        %s168 = ssub.s32 %s18, 1
        // Predicated region
        $region13: #{tpu_custom_call.1} parent=11 // pred_check
          %p169 = pneg %p65
        $region14: #{tpu_custom_call.1} parent=11 // pred_check_branch
          %171 = sbr.rel (%p169) target = $region16
        $region15: #{tpu_custom_call.1} parent=11 // pred_region
          %s173 = ssub.s32 4096, 4096
          %174 = vsyncadd [#allocation6], %s173
          %s175 = sshll.u32 [#allocation5], 4
          %s176 = int_to_ptr.vmem [resolvable:$true] %s175
          %181 = dma.hbm_to_vmem [thread:$0]  %s1, 4096, %s176, [#allocation6], 128, 128, 8
        $region16: #{tpu_custom_call.1} parent=11 // pred_fallthru
          _
        // Predicated region
        $region17: #{tpu_custom_call.1} parent=11 // pred_check
          %p182 = pneg %p86
        $region18: #{tpu_custom_call.1} parent=11 // pred_check_branch
          %184 = sbr.rel (%p182) target = $region20
        $region19: #{tpu_custom_call.1} parent=11 // pred_region
          _
        $region20: #{tpu_custom_call.1} parent=11 // pred_fallthru
          _
        // Predicated region
        $region21: #{tpu_custom_call.1} parent=11 // pred_check
          %p185 = pneg %p107
        $region22: #{tpu_custom_call.1} parent=11 // pred_check_branch
          %187 = sbr.rel (%p185) target = $region24
        $region23: #{tpu_custom_call.1} parent=11 // pred_region
          _
        $region24: #{tpu_custom_call.1} parent=11 // pred_fallthru
          _
        // Predicated region
        $region25: #{tpu_custom_call.1} parent=11 // pred_check
          %p188 = pneg %p128
        $region26: #{tpu_custom_call.1} parent=11 // pred_check_branch
          %190 = sbr.rel (%p188) target = $region28
        $region27: #{tpu_custom_call.1} parent=11 // pred_region
          _
        $region28: #{tpu_custom_call.1} parent=11 // pred_fallthru
          _
      $region12: #{tpu_custom_call.1} parent=5 // pred_fallthru
        _
      %p191 = scmp.lt.s32.totalorder %s18, 2
      // Predicated region
      $region29: #{tpu_custom_call.1} parent=5 // pred_check
        %p192 = pneg %p191
      $region30: #{tpu_custom_call.1} parent=5 // pred_check_branch
        %194 = sbr.rel (%p192) target = $region32
      $region31: #{tpu_custom_call.1} parent=5 // pred_region
        // Predicated region
        $region33: #{tpu_custom_call.1} parent=31 // pred_check
          %p195 = pneg %p38
        $region34: #{tpu_custom_call.1} parent=31 // pred_check_branch
          %197 = sbr.rel (%p195) target = $region36
        $region35: #{tpu_custom_call.1} parent=31 // pred_region
          %s198 = sand.u32 %s28, 1
          %s199 = scalar_lea.sflag [#allocation3], %s198
          %s200 = sand.u32 %s28, 1
          %s201 = smul.addr %s200, 32
          %s202 = scalar_lea.vmem [#allocation2], %s201
          %s203 = smul.u32 2, %s18
          %s205 = ssub.s32 512, 512
          %206 = vsyncadd %s199, %s205
          %s207 = smul.addr %s203, 2
          %s208 = smul.addr %s207, 128
          %s209 = scalar_lea.hbm %s0, %s208
          %s210 = sshll.u32 %s202, 4
          %s211 = int_to_ptr.vmem [resolvable:$true] %s210
          %216 = dma.hbm_to_vmem [thread:$0]  %s209, 512, %s211, %s199, 256, 256, 16
        $region36: #{tpu_custom_call.1} parent=31 // pred_fallthru
          _
      $region32: #{tpu_custom_call.1} parent=5 // pred_fallthru
        _
      %p217 = scmp.le.s32.totalorder 1, %s18
      %p218 = scmp.lt.s32.totalorder %s18, 3
      %p219 = pnand %p217, %p218
      %p220 = pneg %p219
      // Predicated region
      $region37: #{tpu_custom_call.1} parent=5 // pred_check
        _
      $region38: #{tpu_custom_call.1} parent=5 // pred_check_branch
        %222 = sbr.rel (%p219) target = $region40
      $region39: #{tpu_custom_call.1} parent=5 // pred_region
        %s223 = ssub.s32 %s18, 1
        %s224 = sand.u32 %s31, 1
        %s225 = scalar_lea.sflag [#allocation3], %s224
        %s226 = sand.u32 %s31, 1
        %s227 = smul.addr %s226, 32
        %s228 = scalar_lea.vmem [#allocation2], %s227
        // Predicated region
        $region41: #{tpu_custom_call.1} parent=39 // pred_check
          %p229 = pneg %p44
        $region42: #{tpu_custom_call.1} parent=39 // pred_check_branch
          %231 = sbr.rel (%p229) target = $region44
        $region43: #{tpu_custom_call.1} parent=39 // pred_region
          %232 = dma.done %s225, 512
        $region44: #{tpu_custom_call.1} parent=39 // pred_fallthru
          _
        // Predicated region
        $region45: #{tpu_custom_call.1} parent=39 // pred_check
          %p233 = pneg %p65
        $region46: #{tpu_custom_call.1} parent=39 // pred_check_branch
          %235 = sbr.rel (%p233) target = $region48
        $region47: #{tpu_custom_call.1} parent=39 // pred_region
          %236 = dma.done [#allocation6], 4096
        $region48: #{tpu_custom_call.1} parent=39 // pred_fallthru
          _
        %s237 = sand.u32 %s31, 1
        %s238 = scalar_lea.sflag [#allocation3], %s237
        %s239 = sand.u32 %s31, 1
        %s240 = smul.addr %s239, 32
        %s241 = scalar_lea.vmem [#allocation2], %s240
        %p242 = pneg %p44
        %p243 = pneg %p41
        %p244 = pneg %p65
        %p245 = pneg %p62
        %p246 = pneg %p86
        %p247 = pneg %p83
        %p248 = pneg %p107
        %p249 = pneg %p104
        %p250 = pneg %p128
        %p251 = pneg %p125
        %p252 = pneg %p154
        %p253 = pneg %p151
        %s254 = sand.u32 %s141, 1
        %s255 = scalar_lea.sflag [#allocation4], %s254
        %s256 = sand.u32 %s141, 1
        %s257 = smul.addr %s256, 32
        %s258 = scalar_lea.vmem [#allocation7], %s257
        %s259 = smul.u32 2, %s23
        %s260 = smul.u32 2, %s23
        %v261 = vld [vmem:[%s228] sm:$0xff]
        %v262 = vld [vmem:[%s228 + $0x8] sm:$0xff]
        %v263 = vld [vmem:[%s228 + $0x10] sm:$0xff]
        %v264 = vld [vmem:[%s228 + $0x18] sm:$0xff]
        %v265 = vpack.c.bf16 %v263, %v261
        %v266 = vpack.c.bf16 %v264, %v262
        %v267 = vld [vmem:[#allocation5] sm:$0xff]
        %v268 = vld [vmem:[#allocation5 + $0x8] sm:$0xff]
        %v269 = vld [vmem:[#allocation5 + $0x10] sm:$0xff]
        %v270 = vld [vmem:[#allocation5 + $0x18] sm:$0xff]
        %v271 = vld [vmem:[#allocation5 + $0x20] sm:$0xff]
        %v272 = vld [vmem:[#allocation5 + $0x28] sm:$0xff]
        %v273 = vld [vmem:[#allocation5 + $0x30] sm:$0xff]
        %v274 = vld [vmem:[#allocation5 + $0x38] sm:$0xff]
        %v275 = vld [vmem:[#allocation5 + $0x40] sm:$0xff]
        %v276 = vld [vmem:[#allocation5 + $0x48] sm:$0xff]
        %v277 = vld [vmem:[#allocation5 + $0x50] sm:$0xff]
        %v278 = vld [vmem:[#allocation5 + $0x58] sm:$0xff]
        %v279 = vld [vmem:[#allocation5 + $0x60] sm:$0xff]
        %v280 = vld [vmem:[#allocation5 + $0x68] sm:$0xff]
        %v281 = vld [vmem:[#allocation5 + $0x70] sm:$0xff]
        %v282 = vld [vmem:[#allocation5 + $0x78] sm:$0xff]
        %v283 = vld [vmem:[#allocation5 + $0x80] sm:$0xff]
        %v284 = vld [vmem:[#allocation5 + $0x88] sm:$0xff]
        %v285 = vld [vmem:[#allocation5 + $0x90] sm:$0xff]
        %v286 = vld [vmem:[#allocation5 + $0x98] sm:$0xff]
        %v287 = vld [vmem:[#allocation5 + $0xa0] sm:$0xff]
        %v288 = vld [vmem:[#allocation5 + $0xa8] sm:$0xff]
        %v289 = vld [vmem:[#allocation5 + $0xb0] sm:$0xff]
        %v290 = vld [vmem:[#allocation5 + $0xb8] sm:$0xff]
        %v291 = vld [vmem:[#allocation5 + $0xc0] sm:$0xff]
        %v292 = vld [vmem:[#allocation5 + $0xc8] sm:$0xff]
        %v293 = vld [vmem:[#allocation5 + $0xd0] sm:$0xff]
        %v294 = vld [vmem:[#allocation5 + $0xd8] sm:$0xff]
        %v295 = vld [vmem:[#allocation5 + $0xe0] sm:$0xff]
        %v296 = vld [vmem:[#allocation5 + $0xe8] sm:$0xff]
        %v297 = vld [vmem:[#allocation5 + $0xf0] sm:$0xff]
        %v298 = vld [vmem:[#allocation5 + $0xf8] sm:$0xff]
        %v331 = vunpack.c.l.b16 %v267
        %v332 = vunpack.c.h.b16 %v267
        %v333 = vunpack.c.l.b16 %v268
        %v334 = vunpack.c.h.b16 %v268
        %v335 = vunpack.c.l.b16 %v269
        %v336 = vunpack.c.h.b16 %v269
        %v337 = vunpack.c.l.b16 %v270
        %v338 = vunpack.c.h.b16 %v270
        %v339 = vunpack.c.l.b16 %v271
        %v340 = vunpack.c.h.b16 %v271
        %v341 = vunpack.c.l.b16 %v272
        %v342 = vunpack.c.h.b16 %v272
        %v343 = vunpack.c.l.b16 %v273
        %v344 = vunpack.c.h.b16 %v273
        %v345 = vunpack.c.l.b16 %v274
        %v346 = vunpack.c.h.b16 %v274
        %v347 = vunpack.c.l.b16 %v275
        %v348 = vunpack.c.h.b16 %v275
        %v349 = vunpack.c.l.b16 %v276
        %v350 = vunpack.c.h.b16 %v276
        %v351 = vunpack.c.l.b16 %v277
        %v352 = vunpack.c.h.b16 %v277
        %v353 = vunpack.c.l.b16 %v278
        %v354 = vunpack.c.h.b16 %v278
        %v355 = vunpack.c.l.b16 %v279
        %v356 = vunpack.c.h.b16 %v279
        %v357 = vunpack.c.l.b16 %v280
        %v358 = vunpack.c.h.b16 %v280
        %v359 = vunpack.c.l.b16 %v281
        %v360 = vunpack.c.h.b16 %v281
        %v361 = vunpack.c.l.b16 %v282
        %v362 = vunpack.c.h.b16 %v282
        %v363 = vunpack.c.l.b16 %v283
        %v364 = vunpack.c.h.b16 %v283
        %v365 = vunpack.c.l.b16 %v284
        %v366 = vunpack.c.h.b16 %v284
        %v367 = vunpack.c.l.b16 %v285
        %v368 = vunpack.c.h.b16 %v285
        %v369 = vunpack.c.l.b16 %v286
        %v370 = vunpack.c.h.b16 %v286
        %v371 = vunpack.c.l.b16 %v287
        %v372 = vunpack.c.h.b16 %v287
        %v373 = vunpack.c.l.b16 %v288
        %v374 = vunpack.c.h.b16 %v288
        %v375 = vunpack.c.l.b16 %v289
        %v376 = vunpack.c.h.b16 %v289
        %v377 = vunpack.c.l.b16 %v290
        %v378 = vunpack.c.h.b16 %v290
        %v379 = vunpack.c.l.b16 %v291
        %v380 = vunpack.c.h.b16 %v291
        %v381 = vunpack.c.l.b16 %v292
        %v382 = vunpack.c.h.b16 %v292
        %v383 = vunpack.c.l.b16 %v293
        %v384 = vunpack.c.h.b16 %v293
        %v385 = vunpack.c.l.b16 %v294
        %v386 = vunpack.c.h.b16 %v294
        %v387 = vunpack.c.l.b16 %v295
        %v388 = vunpack.c.h.b16 %v295
        %v389 = vunpack.c.l.b16 %v296
        %v390 = vunpack.c.h.b16 %v296
        %v391 = vunpack.c.l.b16 %v297
        %v392 = vunpack.c.h.b16 %v297
        %v393 = vunpack.c.l.b16 %v298
        %v394 = vunpack.c.h.b16 %v298
        %v395 = vpack.c.b16 %v333, %v331
        %v396 = vpack.c.b16 %v334, %v332
        %v397 = vpack.c.b16 %v337, %v335
        %v398 = vpack.c.b16 %v338, %v336
        %v399 = vpack.c.b16 %v341, %v339
        %v400 = vpack.c.b16 %v342, %v340
        %v401 = vpack.c.b16 %v345, %v343
        %v402 = vpack.c.b16 %v346, %v344
        %v403 = vpack.c.b16 %v349, %v347
        %v404 = vpack.c.b16 %v350, %v348
        %v405 = vpack.c.b16 %v353, %v351
        %v406 = vpack.c.b16 %v354, %v352
        %v407 = vpack.c.b16 %v357, %v355
        %v408 = vpack.c.b16 %v358, %v356
        %v409 = vpack.c.b16 %v361, %v359
        %v410 = vpack.c.b16 %v362, %v360
        %v411 = vpack.c.b16 %v365, %v363
        %v412 = vpack.c.b16 %v366, %v364
        %v413 = vpack.c.b16 %v369, %v367
        %v414 = vpack.c.b16 %v370, %v368
        %v415 = vpack.c.b16 %v373, %v371
        %v416 = vpack.c.b16 %v374, %v372
        %v417 = vpack.c.b16 %v377, %v375
        %v418 = vpack.c.b16 %v378, %v376
        %v419 = vpack.c.b16 %v381, %v379
        %v420 = vpack.c.b16 %v382, %v380
        %v421 = vpack.c.b16 %v385, %v383
        %v422 = vpack.c.b16 %v386, %v384
        %v423 = vpack.c.b16 %v389, %v387
        %v424 = vpack.c.b16 %v390, %v388
        %v425 = vpack.c.b16 %v393, %v391
        %v426 = vpack.c.b16 %v394, %v392
        %459 = vmatprep.subr.bf16.mxu0 %v410
        %460 = vmatpush1.bf16.msra.mxu0 %v409
        %461 = vmatprep.subr.bf16.mxu0 %v408
        %462 = vmatpush1.bf16.msra.mxu0 %v407
        %463 = vmatprep.subr.bf16.mxu0 %v406
        %464 = vmatpush1.bf16.msra.mxu0 %v405
        %465 = vmatprep.subr.bf16.mxu0 %v404
        %466 = vmatpush1.bf16.msra.mxu0 %v403
        %467 = vmatprep.subr.bf16.mxu0 %v402
        %468 = vmatpush1.bf16.msra.mxu0 %v401
        %469 = vmatprep.subr.bf16.mxu0 %v400
        %470 = vmatpush1.bf16.msra.mxu0 %v399
        %471 = vmatprep.subr.bf16.mxu0 %v398
        %472 = vmatpush1.bf16.msra.mxu0 %v397
        %473 = vmatprep.subr.bf16.mxu0 %v396
        %474 = vmatpush1.bf16.msra.mxu0 %v395
        %475 = vmatprep.subr.bf16.mxu0 %v426
        %476 = vmatpush2.bf16.msra.mxu0 %v425
        %477 = vmatprep.subr.bf16.mxu0 %v424
        %478 = vmatpush2.bf16.msra.mxu0 %v423
        %479 = vmatprep.subr.bf16.mxu0 %v422
        %480 = vmatpush2.bf16.msra.mxu0 %v421
        %481 = vmatprep.subr.bf16.mxu0 %v420
        %482 = vmatpush2.bf16.msra.mxu0 %v419
        %483 = vmatprep.subr.bf16.mxu0 %v418
        %484 = vmatpush2.bf16.msra.mxu0 %v417
        %485 = vmatprep.subr.bf16.mxu0 %v416
        %486 = vmatpush2.bf16.msra.mxu0 %v415
        %487 = vmatprep.subr.bf16.mxu0 %v414
        %488 = vmatpush2.bf16.msra.mxu0 %v413
        %489 = vmatprep.subr.bf16.mxu0 %v412
        %490 = vmatpush2.bf16.msra.mxu0 %v411
        %491 = vmatprep.mubr.bf16.mxu0 %v266
        %492 = vmatmul.mubr.bf16.gmra.mxu0 %v265
        %v493 = vpop.f32.mrf.mxu0
        %v494 = vadd.f32 0.0, %v493
        %v495 = vpop.f32.mrf.mxu0
        %v496 = vadd.f32 0.0, %v495
        %v497 = vpop.f32.mrf.mxu0
        %v498 = vadd.f32 0.0, %v497
        %v499 = vpop.f32.mrf.mxu0
        %v500 = vadd.f32 0.0, %v499
        %501 = vdwg.mxu0
        %v502 = vadd.f32 %v261, %v494
        %v503 = vadd.f32 %v262, %v496
        %v504 = vadd.f32 %v263, %v498
        %v505 = vadd.f32 %v264, %v500
        %v506 = vld [vmem:[%s2] sm:$0x3]
        %v508 = vlaneseq
        %v509 = vshrl.u32 %v508, 7
        %v510 = vsub.s32 0, %v509
        %v511 = vrot.slane %v506, %v510
        %v512 = vlaneseq
        %v513 = vshrl.u32 %v512, 7
        %v514 = vsub.s32 1, %v513
        %v515 = vrot.slane %v506, %v514
        %v518 = vadd.f32 %v502, %v511
        %v519 = vadd.f32 %v503, %v515
        %v520 = vadd.f32 %v504, %v511
        %v521 = vadd.f32 %v505, %v515
        %v522 = vld [vmem:[%s3] sm:$0x3]
        %v523 = vld [vmem:[%s4] sm:$0x3]
        %v524 = vadd.f32 %v518, %v519
        %525 = vadd.xlane.f32.xlu0 %v524
        %v526 = vpop.xlane.xlu0 %525
        %v527 = vadd.f32 %v520, %v521
        %528 = vadd.xlane.f32.xlu0 %v527
        %v529 = vpop.xlane.xlu0 %528
        %v530 = vmul.f32 %v518, %v518
        %v531 = vmul.f32 %v519, %v519
        %v532 = vmul.f32 %v520, %v520
        %v533 = vmul.f32 %v521, %v521
        %v534 = vadd.f32 %v530, %v531
        %535 = vadd.xlane.f32.xlu0 %v534
        %v536 = vpop.xlane.xlu0 %535
        %v537 = vadd.f32 %v532, %v533
        %538 = vadd.xlane.f32.xlu0 %v537
        %v539 = vpop.xlane.xlu0 %538
        %v540 = vmul.f32 %v526, 0.00390625
        %v541 = vmul.f32 %v529, 0.00390625
        %v542 = vmul.f32 %v536, 0.00390625
        %v543 = vmul.f32 %v539, 0.00390625
        %v544 = vmul.f32 %v540, %v540
        %v545 = vmul.f32 %v541, %v541
        %v546 = vsub.f32 %v542, %v544
        %v547 = vsub.f32 %v543, %v545
        %v548 = vmax.f32 %v546, 0.0
        %v549 = vmax.f32 %v547, 0.0
        %v550 = vadd.f32 %v548, 1e-06
        %v551 = vadd.f32 %v549, 1e-06
        %v552 = vrsqrt.pop %v550
        %v553 = vrsqrt.pop %v551
        %v554 = vsub.f32 %v518, %v540
        %v555 = vsub.f32 %v519, %v540
        %v556 = vsub.f32 %v520, %v541
        %v557 = vsub.f32 %v521, %v541
        %v558 = vmul.f32 %v554, %v552
        %v559 = vmul.f32 %v555, %v552
        %v560 = vmul.f32 %v556, %v553
        %v561 = vmul.f32 %v557, %v553
        %v563 = vlaneseq
        %v564 = vshrl.u32 %v563, 7
        %v565 = vsub.s32 0, %v564
        %v566 = vrot.slane %v522, %v565
        %v567 = vlaneseq
        %v568 = vshrl.u32 %v567, 7
        %v569 = vsub.s32 1, %v568
        %v570 = vrot.slane %v522, %v569
        %v573 = vmul.f32 %v558, %v566
        %v574 = vmul.f32 %v559, %v570
        %v575 = vmul.f32 %v560, %v566
        %v576 = vmul.f32 %v561, %v570
        %v578 = vlaneseq
        %v579 = vshrl.u32 %v578, 7
        %v580 = vsub.s32 0, %v579
        %v581 = vrot.slane %v523, %v580
        %v582 = vlaneseq
        %v583 = vshrl.u32 %v582, 7
        %v584 = vsub.s32 1, %v583
        %v585 = vrot.slane %v523, %v584
        %v588 = vadd.f32 %v573, %v581
        %v589 = vadd.f32 %v574, %v585
        %v590 = vadd.f32 %v575, %v581
        %v591 = vadd.f32 %v576, %v585
        %592 = vst [vmem:[%s258] sm:$0xff] %v588
        %593 = vst [vmem:[%s258 + $0x8] sm:$0xff] %v589
        %594 = vst [vmem:[%s258 + $0x10] sm:$0xff] %v590
        %595 = vst [vmem:[%s258 + $0x18] sm:$0xff] %v591
        %s596 = sand.u32 %s141, 1
        %s597 = scalar_lea.sflag [#allocation4], %s596
        %s598 = sand.u32 %s141, 1
        %s599 = smul.addr %s598, 32
        %s600 = scalar_lea.vmem [#allocation7], %s599
        // Predicated region
        $region49: #{tpu_custom_call.1} parent=39 // pred_check
          %p601 = pneg %p151
        $region50: #{tpu_custom_call.1} parent=39 // pred_check_branch
          %603 = sbr.rel (%p601) target = $region52
        $region51: #{tpu_custom_call.1} parent=39 // pred_region
          %s604 = smul.u32 2, %s23
          %s606 = ssub.s32 512, 512
          %607 = vsyncadd %s597, %s606
          %s608 = smul.addr %s604, 2
          %s609 = smul.addr %s608, 128
          %s610 = scalar_lea.hbm %s5, %s609
          %s611 = sshll.u32 %s600, 4
          %s612 = int_to_ptr.vmem [resolvable:$true] %s611
          %617 = dma.vmem_to_hbm [thread:$0]  %s612, 512, %s610, %s597, 256, 256, 16
        $region52: #{tpu_custom_call.1} parent=39 // pred_fallthru
          _
      $region40: #{tpu_custom_call.1} parent=5 // pred_fallthru
        _
      %p618 = scmp.le.s32.totalorder 2, %s18
      // Predicated region
      $region53: #{tpu_custom_call.1} parent=5 // pred_check
        %p619 = pneg %p618
      $region54: #{tpu_custom_call.1} parent=5 // pred_check_branch
        %621 = sbr.rel (%p619) target = $region56
      $region55: #{tpu_custom_call.1} parent=5 // pred_region
        %s622 = ssub.s32 %s18, 2
        // Predicated region
        $region57: #{tpu_custom_call.1} parent=55 // pred_check
          %p623 = pneg %p157
        $region58: #{tpu_custom_call.1} parent=55 // pred_check_branch
          %625 = sbr.rel (%p623) target = $region60
        $region59: #{tpu_custom_call.1} parent=55 // pred_region
          %s626 = sand.u32 %s142, 1
          %s627 = scalar_lea.sflag [#allocation4], %s626
          %s628 = sand.u32 %s142, 1
          %s629 = smul.addr %s628, 32
          %s630 = scalar_lea.vmem [#allocation7], %s629
          %631 = dma.done %s627, 512
        $region60: #{tpu_custom_call.1} parent=55 // pred_fallthru
          _
      $region56: #{tpu_custom_call.1} parent=5 // pred_fallthru
        _
    $region6: #{tpu_custom_call.1} parent=1 // loop_footer
      %s22 = sadd.s32 1, %s18
    $region7: #{tpu_custom_call.1} parent=1 // loop_footer_branch
      %17 = sbr.rel target = $region3
    $region8: #{tpu_custom_call.1} parent=1 // loop_exit
      _
    %632 = vsyncpa [#allocation3], 1
    %s633 = scalar_lea.sflag [#allocation3], 1
    %634 = vsyncpa %s633, 1
    %635 = vsyncpa [#allocation6], 1
    %636 = vsyncpa [#allocation4], 1
    %s637 = scalar_lea.sflag [#allocation4], 1
    %638 = vsyncpa %s637, 1

</llo_original>
